<compile_context>
chip_gen: v5e
topology: v5e:2x2
jax: 0.10.0
libtpu: 0.0.40
codegen_flags: <defaults>
</compile_context>

<pallas_src>
import jax
import jax.numpy as jnp
from jax.experimental import pallas as pl
from jax.experimental.pallas import tpu as pltpu


def _round_up(x, m):
    return ((x + m - 1) // m) * m


def _predecoder_kernel(x_ref, w_ref, b_ref, o_ref):
    # One M-tile of the linear layer: Y = X @ W + b
    # MXU matmul with f32 accumulation, f32 bias add on the VPU.
    acc = jnp.dot(x_ref[...], w_ref[...], preferred_element_type=jnp.float32)
    o_ref[...] = (acc + b_ref[...].astype(jnp.float32)).astype(o_ref.dtype)


def prepare_params(weight, bias, *, compute_dtype=None):
    """One-time parameter preparation (do this OUTSIDE the per-call hot path).

    weight: (att_dim, in_features)  -- PyTorch nn.Linear layout
    bias:   (att_dim,)
    Returns (w_kn_pad, b_pad, att_dim):
      w_kn_pad: (in_features, N_pad) weight transposed and zero-padded so the
                output lane dim is a multiple of 128 (lane-dense stores).
      b_pad:    (1, N_pad) zero-padded bias (kept f32 for the f32 add).
    """
    att_dim, in_features = weight.shape
    assert bias.shape == (att_dim,)
    n_pad = _round_up(att_dim, 128)

    w_kn = weight.T  # (K, N) -- contraction along K, done once here
    if compute_dtype is not None:
        w_kn = w_kn.astype(compute_dtype)
    if n_pad != att_dim:
        w_kn = jnp.pad(w_kn, ((0, 0), (0, n_pad - att_dim)))
        b = jnp.pad(bias, (0, n_pad - att_dim))
    else:
        b = bias
    return w_kn, b.reshape(1, n_pad), att_dim


def _choose_tm(m, k, n_pad, in_itemsize, out_itemsize,
               *, vmem_budget_bytes=24 * 1024 * 1024, tm_max=1024):
    """Largest multiple-of-8 M tile that keeps streamed buffers in budget."""
    # Resident weight is double-buffered by the pipeline even with a constant
    # index map; reserve its space first.
    weight_bytes = 2 * k * n_pad * in_itemsize
    stream_budget = max(vmem_budget_bytes - weight_bytes, 1 << 20)
    per_row = 2 * (k * in_itemsize + n_pad * out_itemsize)  # 2x: double-buffered
    tm = stream_budget // max(per_row, 1)
    tm = max(8, min(tm_max, (tm // 8) * 8))
    tm = min(tm, _round_up(m, 8))
    return max(tm, 8)


def predecoder_forward(enc_h, w_kn_pad, b_pad, att_dim,
                       *, compute_dtype=None, tm_max=1024):
    """enc_h: (B, T, in_features); w_kn_pad/b_pad from prepare_params()."""
    B, T, K = enc_h.shape
    Kw, N_pad = w_kn_pad.shape
    assert Kw == K and b_pad.shape == (1, N_pad)
    out_dtype = enc_h.dtype

    x2d = enc_h.reshape(B * T, K)
    if compute_dtype is not None:
        x2d = x2d.astype(compute_dtype)
    M = B * T

    in_itemsize = x2d.dtype.itemsize
    out_itemsize = jnp.dtype(out_dtype).itemsize
    TM = _choose_tm(M, K, N_pad, in_itemsize, out_itemsize, tm_max=tm_max)
    M_pad = _round_up(M, TM)
    if M_pad != M:
        x2d = jnp.pad(x2d, ((0, M_pad - M), (0, 0)))

    grid = (M_pad // TM,)

    cost = pl.CostEstimate(
        flops=2 * M_pad * K * N_pad,
        transcendentals=0,
        bytes_accessed=(M_pad * K * in_itemsize
                        + K * N_pad * w_kn_pad.dtype.itemsize
                        + N_pad * b_pad.dtype.itemsize
                        + M_pad * N_pad * out_itemsize),
    )

    out2d = pl.pallas_call(
        _predecoder_kernel,
        out_shape=jax.ShapeDtypeStruct((M_pad, N_pad), out_dtype),
        grid_spec=pltpu.PrefetchScalarGridSpec(
            num_scalar_prefetch=0,
            grid=grid,
            in_specs=[
                pl.BlockSpec((TM, K), lambda i: (i, 0)),       # streamed X tile
                pl.BlockSpec((K, N_pad), lambda i: (0, 0)),    # resident weight
                pl.BlockSpec((1, N_pad), lambda i: (0, 0)),    # resident bias
            ],
            out_specs=pl.BlockSpec((TM, N_pad), lambda i: (i, 0)),
        ),
        compiler_params=pltpu.CompilerParams(
            dimension_semantics=("parallel",),   # disjoint M tiles -> megacore
            vmem_limit_bytes=32 * 1024 * 1024,   # tiles sized to fit this budget
        ),
        cost_estimate=cost,
    )(x2d, w_kn_pad, b_pad)

    # Slice away M padding and lane padding, restore (B, T, att_dim).
    return out2d[:M, :att_dim].reshape(B, T, att_dim)


if __name__ == "__main__":
    # Small synthetic shapes consistent with the module's forward:
    # enc_h: (batch, enc_h_length, in_features)
    B, T, IN_FEATURES, ATT_DIM = 2, 8, 32, 32

    key = jax.random.PRNGKey(0)
    k_x, k_w, k_b = jax.random.split(key, 3)

    enc_h = jax.random.normal(k_x, (B, T, IN_FEATURES), dtype=jnp.float32)
    # Deterministic synthetic Linear parameters (PyTorch convention: W is (out, in))
    weight = jax.random.normal(k_w, (ATT_DIM, IN_FEATURES), dtype=jnp.float32) * 0.1
    bias = jax.random.normal(k_b, (ATT_DIM,), dtype=jnp.float32) * 0.1

    # Parameter prep once (transpose + lane padding outside the hot path).
    w_kn_pad, b_pad, att_dim = prepare_params(weight, bias)

    out = predecoder_forward(enc_h, w_kn_pad, b_pad, att_dim)
    out = jax.block_until_ready(out)

    # Reference check in plain JAX (same math as nn.Linear forward)
    ref = jnp.einsum("btk,nk->btn", enc_h, weight) + bias
    assert out.shape == (B, T, ATT_DIM)
    assert jnp.allclose(out, ref, atol=1e-5, rtol=1e-5)

    print("KERNEL_OK")
</pallas_src>

<mosaic_0001>
module attributes {stable_mosaic.version = 11 : i64} {
  func.func @_predecoder_kernel(%arg0: i32, %arg1: memref<16x32xf32, #tpu.memory_space<vmem>>, %arg2: memref<32x128xf32, #tpu.memory_space<vmem>>, %arg3: memref<1x128xf32, #tpu.memory_space<vmem>>, %arg4: memref<16x128xf32, #tpu.memory_space<vmem>>) attributes {dimension_semantics = [#tpu.dimension_semantics<parallel>], iteration_bounds = array<i64: 1>, scalar_prefetch = 0 : i64, scratch_operands = 0 : i64, tpu.core_type = #tpu.core_type<tc>, window_params = [{transform_indices = @transform_0, window_bounds = array<i64: 16, 32>}, {pipeline_mode = #tpu.pipeline_mode<synchronous>, transform_indices = @transform_1, window_bounds = array<i64: 32, 128>}, {pipeline_mode = #tpu.pipeline_mode<synchronous>, transform_indices = @transform_2, window_bounds = array<i64: 1, 128>}, {transform_indices = @transform_3, window_bounds = array<i64: 16, 128>}]} {
    %c0 = arith.constant 0 : index
    %c0_0 = arith.constant 0 : index
    %0 = vector.load %arg1[%c0, %c0_0] : memref<16x32xf32, #tpu.memory_space<vmem>>, vector<16x32xf32>
    %c0_1 = arith.constant 0 : index
    %c0_2 = arith.constant 0 : index
    %1 = vector.load %arg2[%c0_1, %c0_2] : memref<32x128xf32, #tpu.memory_space<vmem>>, vector<32x128xf32>
    %cst = arith.constant dense<0.000000e+00> : vector<16x128xf32>
    %2 = tpu.matmul %0, %1, %cst {dimension_numbers = #tpu.dot_dimension_numbers<[1], [0], [0], [1], [0, 0, 1, 1], [], []>} : vector<16x32xf32>, vector<32x128xf32>, vector<16x128xf32> -> vector<16x128xf32>
    %c0_3 = arith.constant 0 : index
    %c0_4 = arith.constant 0 : index
    %3 = vector.load %arg3[%c0_3, %c0_4] : memref<1x128xf32, #tpu.memory_space<vmem>>, vector<1x128xf32>
    %4 = vector.broadcast %3 : vector<1x128xf32> to vector<16x128xf32>
    %5 = arith.addf %2, %4 : vector<16x128xf32>
    %c0_5 = arith.constant 0 : index
    %c0_6 = arith.constant 0 : index
    %6 = vector.load %arg4[%c0_5, %c0_6] : memref<16x128xf32, #tpu.memory_space<vmem>>, vector<16x128xf32>
    tpu.vector_store %arg4[%c0_5, %c0_6], %5 {strides = array<i32>} : memref<16x128xf32, #tpu.memory_space<vmem>>, vector<16x128xf32>,
    return
  }
  func.func @transform_0(%arg0: i32) -> (i32, i32) {
    %c0_i32 = arith.constant 0 : i32
    %c0_i32_0 = arith.constant 0 : i32
    return %arg0, %c0_i32 : i32, i32
  }
  func.func @transform_1(%arg0: i32) -> (i32, i32) {
    %c0_i32 = arith.constant 0 : i32
    %c0_i32_0 = arith.constant 0 : i32
    %c0_i32_1 = arith.constant 0 : i32
    return %c0_i32, %c0_i32_0 : i32, i32
  }
  func.func @transform_2(%arg0: i32) -> (i32, i32) {
    %c0_i32 = arith.constant 0 : i32
    %c0_i32_0 = arith.constant 0 : i32
    %c0_i32_1 = arith.constant 0 : i32
    return %c0_i32, %c0_i32_0 : i32, i32
  }
  func.func @transform_3(%arg0: i32) -> (i32, i32) {
    %c0_i32 = arith.constant 0 : i32
    %c0_i32_0 = arith.constant 0 : i32
    return %arg0, %c0_i32 : i32, i32
  }
}

</mosaic_0001>

<llo_original>
// kernel: tpu_custom_call.1
$region0: #{tpu_custom_call.1}
  #allocation0 [shape = 'u32[]', space=smem, size = 0x4, offset = 0x4, fixed_abs, tag = 'smem constant byte address 0x4 - core index']
  #allocation1 [shape = 'u32[72,128]{1,0:T(1,128)}', space=vmem, size = 0x9000, scoped, tag = 'internal scratch']
  %s0 = inlined_call_operand.hbm [shape: f32[16,32], index: 0, kind: input, shape index: {}]
  %s1 = inlined_call_operand.hbm [shape: f32[32,128], index: 1, kind: input, shape index: {}]
  %s2 = inlined_call_operand.vmem [shape: f32[1,128], index: 2, kind: input, shape index: {}]
  %s3 = inlined_call_operand.hbm [shape: f32[16,128], index: 3, kind: output, shape index: {}]
  %s4 = sld [smem:[#allocation0]]
  $region30: #{tpu_custom_call.1} parent=0
    _
  %s6 = ssub.s32 1, %s4
  %s7 = scalar_select 0, %s6, %s4
  $region1: #{tpu_custom_call.1} parent=0
    #allocation2 [shape = 'u8[8192]{0}', space=vmem, size = 0x2000, scoped, tag = 'input window, operand 0, single buffered']
    #allocation3 [shape = 's32[1]{0}', space=sflag, size = 0x4, scoped, tag = 'scoped memory for tpu_custom_call.1']
    #allocation4 [shape = 's32[1]{0}', space=sflag, size = 0x4, scoped, tag = 'scoped memory for tpu_custom_call.1']
    #allocation5 [shape = 'u8[16384]{0}', space=vmem, size = 0x4000, scoped, tag = 'input window, operand 1, single buffered']
    #allocation6 [shape = 's32[1]{0}', space=sflag, size = 0x4, scoped, tag = 'scoped memory for tpu_custom_call.1']
    #allocation7 [shape = 'u8[8192]{0}', space=vmem, size = 0x2000, scoped, tag = 'output window, operand 0, single buffered']
    %8 = vsyncpa [#allocation3], 0
    %9 = vsyncpa [#allocation6], 0
    %10 = vsyncpa [#allocation4], 0
    // Predicated region
    $region2: #{tpu_custom_call.1} parent=1 // pred_check
      _
    $region3: #{tpu_custom_call.1} parent=1 // pred_check_branch
      %12 = sbr.rel (0) target = $region5
    $region4: #{tpu_custom_call.1} parent=1 // pred_region
      %14 = vsyncadd [#allocation3], 0
      %s15 = sshll.u32 %s0, 4
      %s16 = int_to_ptr.hbm [resolvable:$true] %s15
      %s17 = sshll.u32 [#allocation2], 4
      %s18 = int_to_ptr.vmem [resolvable:$true] %s17
      %23 = dma.hbm_to_vmem [thread:$0]  %s16, 256, %s18, [#allocation3], 128, 128, 8
    $region5: #{tpu_custom_call.1} parent=1 // pred_fallthru
      _
    // Predicated region
    $region6: #{tpu_custom_call.1} parent=1 // pred_check
      _
    $region7: #{tpu_custom_call.1} parent=1 // pred_check_branch
      %25 = sbr.rel (0) target = $region9
    $region8: #{tpu_custom_call.1} parent=1 // pred_region
      %27 = vsyncadd [#allocation6], 0
      %s28 = sshll.u32 %s1, 4
      %s29 = int_to_ptr.hbm [resolvable:$true] %s28
      %s30 = sshll.u32 [#allocation5], 4
      %s31 = int_to_ptr.vmem [resolvable:$true] %s30
      %36 = dma.hbm_to_vmem [thread:$0]  %s29, 512, %s31, [#allocation6], 128, 128, 8
    $region9: #{tpu_custom_call.1} parent=1 // pred_fallthru
      _
    // Predicated region
    $region10: #{tpu_custom_call.1} parent=1 // pred_check
      _
    $region11: #{tpu_custom_call.1} parent=1 // pred_check_branch
      %38 = sbr.rel (0) target = $region13
    $region12: #{tpu_custom_call.1} parent=1 // pred_region
      _
    $region13: #{tpu_custom_call.1} parent=1 // pred_fallthru
      _
    // Predicated region
    $region14: #{tpu_custom_call.1} parent=1 // pred_check
      _
    $region15: #{tpu_custom_call.1} parent=1 // pred_check_branch
      %40 = sbr.rel (0) target = $region17
    $region16: #{tpu_custom_call.1} parent=1 // pred_region
      %42 = dma.done [#allocation3], 256
    $region17: #{tpu_custom_call.1} parent=1 // pred_fallthru
      _
    // Predicated region
    $region18: #{tpu_custom_call.1} parent=1 // pred_check
      _
    $region19: #{tpu_custom_call.1} parent=1 // pred_check_branch
      %44 = sbr.rel (0) target = $region21
    $region20: #{tpu_custom_call.1} parent=1 // pred_region
      %46 = dma.done [#allocation6], 512
    $region21: #{tpu_custom_call.1} parent=1 // pred_fallthru
      _
    %v47 = vld [vmem:[#allocation2] sm:$0xff]
    %v48 = vld [vmem:[#allocation2 + $0x8] sm:$0xff]
    %v49 = vld [vmem:[#allocation5] sm:$0xff]
    %v50 = vld [vmem:[#allocation5 + $0x8] sm:$0xff]
    %v51 = vld [vmem:[#allocation5 + $0x10] sm:$0xff]
    %v52 = vld [vmem:[#allocation5 + $0x18] sm:$0xff]
    %v53 = vld [vmem:[%s2] sm:$0x1]
    %v55 = vperm.slane %v53, 0
    %vm57 = vcmask 261120
    %v59 = vsel %vm57, %v47, 0
    %v62 = vsel %vm57, %v48, 0
    %64 = vmatpush.msra.mxu0 0.0
    %65 = vmatpush.msra.mxu0 0.0
    %66 = vmatpush.msra.mxu0 0.0
    %67 = vmatpush.msra.mxu0 0.0
    %68 = vmatpush.msra.mxu0 0.0
    %69 = vmatpush.msra.mxu0 0.0
    %70 = vmatpush.msra.mxu0 0.0
    %71 = vmatpush.msra.mxu0 0.0
    %72 = vmatpush.msra.mxu0 0.0
    %73 = vmatpush.msra.mxu0 0.0
    %74 = vmatpush.msra.mxu0 0.0
    %75 = vmatpush.msra.mxu0 0.0
    %76 = vmatpush.msra.mxu0 %v52
    %77 = vmatpush.msra.mxu0 %v51
    %78 = vmatpush.msra.mxu0 %v50
    %79 = vmatpush.msra.mxu0 %v49
    %80 = vmatmul.f32.gmra.mxu0 %v59
    %v81 = vpop.f32.mrf.mxu0
    %v82 = vadd.f32 %v55, %v81
    %83 = vmatmul.f32.gmra.mxu0 %v62
    %v84 = vpop.f32.mrf.mxu0
    %v85 = vadd.f32 %v55, %v84
    %86 = vdwg.mxu0
    %87 = vst [vmem:[#allocation7] sm:$0xff] %v82
    %88 = vst [vmem:[#allocation7 + $0x8] sm:$0xff] %v85
    // Predicated region
    $region22: #{tpu_custom_call.1} parent=1 // pred_check
      _
    $region23: #{tpu_custom_call.1} parent=1 // pred_check_branch
      %90 = sbr.rel (0) target = $region25
    $region24: #{tpu_custom_call.1} parent=1 // pred_region
      %92 = vsyncadd [#allocation4], 0
      %s93 = sshll.u32 [#allocation7], 4
      %s94 = int_to_ptr.vmem [resolvable:$true] %s93
      %s95 = sshll.u32 %s3, 4
      %s96 = int_to_ptr.hbm [resolvable:$true] %s95
      %101 = dma.vmem_to_hbm [thread:$0]  %s94, 256, %s96, [#allocation4], 128, 128, 8
    $region25: #{tpu_custom_call.1} parent=1 // pred_fallthru
      _
    // Predicated region
    $region26: #{tpu_custom_call.1} parent=1 // pred_check
      _
    $region27: #{tpu_custom_call.1} parent=1 // pred_check_branch
      %103 = sbr.rel (0) target = $region29
    $region28: #{tpu_custom_call.1} parent=1 // pred_region
      %105 = dma.done [#allocation4], 256
    $region29: #{tpu_custom_call.1} parent=1 // pred_fallthru
      _
    %106 = vsyncpa [#allocation3], 1
    %107 = vsyncpa [#allocation6], 1
    %108 = vsyncpa [#allocation4], 1

</llo_original>
